<compile_context>
chip_gen: v7x
topology: tpu7x:2x2x1
jax: 0.10.0
libtpu: 0.0.40
codegen_flags: <defaults>
</compile_context>

<pallas_src>
import functools

import jax
import jax.numpy as jnp
from jax.experimental import pallas as pl
from jax.experimental.pallas import tpu as pltpu


def _mse_v2_kernel(o_ref, t_ref, out_ref, acc_ref, *, inner, tm, rows,
                   needs_mask):
    i = pl.program_id(1)

    # Pure-VPU elementwise squared difference (accumulate in f32).
    d = o_ref[...].astype(jnp.float32) - t_ref[...].astype(jnp.float32)
    sq = d * d

    if needs_mask:
        # Zero out rows past the true row count (covers both the row tail of
        # the last block and fully-duplicated clamped blocks).
        blk = pl.program_id(0) * inner + i
        row_ids = blk * tm + jax.lax.broadcasted_iota(jnp.int32, (tm, 1), 0)
        sq = jnp.where(row_ids < rows, sq, 0.0)

    if inner == 1:
        # Single inner step per chunk: reduce directly, skip the accumulator.
        out_ref[...] = jnp.sum(sq).reshape(1, 1, 1)
    else:
        @pl.when(i == 0)
        def _():
            acc_ref[...] = jnp.zeros_like(acc_ref)

        # Elementwise accumulate (no cross-lane reduction on the hot path).
        acc_ref[...] += sq

        # Finalize this chunk: one XLU reduce to the per-chunk partial sum.
        @pl.when(i == inner - 1)
        def _():
            out_ref[...] = jnp.sum(acc_ref[...]).reshape(1, 1, 1)


def _round_up(x, m):
    return ((x + m - 1) // m) * m


def mse_loss_v2(output, target, *, target_block_elems=512 * 1024):
    """Pallas implementation of MSELossV2.forward(output, target) -> scalar f32."""
    assert output.shape == target.shape
    assert output.ndim >= 1

    # Divisor for the mean over the leading (non-last) dims.
    n_rows_mean = 1
    for s in output.shape[:-1]:
        n_rows_mean *= s
    n_rows_mean = max(n_rows_mean, 1)

    total = output.size

    # Pick a lane width (multiple of 128) that divides the (possibly minimally
    # padded) element count so the flat reshape is copy-free.
    padded_total = total if total % 128 == 0 else _round_up(total, 128)
    lanes = 128
    for L in (512, 256, 128):
        if padded_total % L == 0:
            lanes = L
            break
    rows = padded_total // lanes

    # Row tile: ~2 MiB f32 per input block, sublane-aligned for any dtype.
    tm = target_block_elems // lanes
    if tm >= rows:
        tm = rows                        # single block: full-dim tile
    else:
        tm = max(32, (tm // 32) * 32)

    steps = -(-rows // tm)               # cdiv
    chunks = 2 if steps >= 2 else 1      # outer "parallel" axis (v7x 2 TCs)
    inner = -(-steps // chunks)

    # Grid may cover slightly more than `rows` rows; clamp + in-kernel mask.
    needs_mask = (chunks * inner * tm != rows)

    o_flat = output.reshape(-1)
    t_flat = target.reshape(-1)
    pad = padded_total - total
    if pad:
        # Zero padding contributes 0 to the sum (rare: total not mult. of 128).
        o_flat = jnp.pad(o_flat, (0, pad))
        t_flat = jnp.pad(t_flat, (0, pad))
    o2 = o_flat.reshape(rows, lanes)
    t2 = t_flat.reshape(rows, lanes)

    if chunks * inner == steps:
        def in_map(c, i):
            return (c * inner + i, 0)
    else:
        last_blk = steps - 1

        def in_map(c, i):
            return (jnp.minimum(c * inner + i, last_blk), 0)

    kernel = functools.partial(
        _mse_v2_kernel, inner=inner, tm=tm, rows=rows, needs_mask=needs_mask)

    partials = pl.pallas_call(
        kernel,
        out_shape=jax.ShapeDtypeStruct((chunks, 1, 1), jnp.float32),
        grid_spec=pltpu.PrefetchScalarGridSpec(
            num_scalar_prefetch=0,
            grid=(chunks, inner),
            in_specs=[
                pl.BlockSpec((tm, lanes), in_map),
                pl.BlockSpec((tm, lanes), in_map),
            ],
            # One resident partial-sum block per chunk (no cross-core sharing).
            out_specs=pl.BlockSpec((1, 1, 1), lambda c, i: (c, 0, 0)),
            scratch_shapes=[pltpu.VMEM((tm, lanes), jnp.float32)],
        ),
        compiler_params=pltpu.CompilerParams(
            dimension_semantics=("parallel", "arbitrary"),
            vmem_limit_bytes=32 * 1024 * 1024,
        ),
    )(o2, t2)

    return jnp.sum(partials) / jnp.float32(n_rows_mean)


if __name__ == "__main__":
    key = jax.random.PRNGKey(0)
    k1, k2, k3, k4, k5, k6 = jax.random.split(key, 6)

    def ref_loss(o, t):
        o = o.astype(jnp.float32)
        t = t.astype(jnp.float32)
        return jnp.mean(jnp.sum((o - t) ** 2, axis=-1))

    # Small shape consistent with the module (batch=2, seq=8, hidden=32).
    out1 = jax.random.normal(k1, (2, 8, 32), dtype=jnp.float32)
    tgt1 = jax.random.normal(k2, (2, 8, 32), dtype=jnp.float32)
    loss1 = jax.block_until_ready(mse_loss_v2(out1, tgt1))
    ref1 = ref_loss(out1, tgt1)
    assert jnp.allclose(loss1, ref1, rtol=1e-4, atol=1e-4), (loss1, ref1)

    # Larger shape: multi-block, odd block count -> clamp + row-mask path.
    out2 = jax.random.normal(k3, (2, 1024, 768), dtype=jnp.float32)
    tgt2 = jax.random.normal(k4, (2, 1024, 768), dtype=jnp.float32)
    loss2 = jax.block_until_ready(mse_loss_v2(out2, tgt2))
    ref2 = ref_loss(out2, tgt2)
    assert jnp.allclose(loss2, ref2, rtol=1e-4, atol=1e-3), (loss2, ref2)

    # Odd hidden size + bf16: exercises the minimal zero-pad fallback + cast.
    out3 = jax.random.normal(k5, (3, 7, 33), dtype=jnp.bfloat16)
    tgt3 = jax.random.normal(k6, (3, 7, 33), dtype=jnp.bfloat16)
    loss3 = jax.block_until_ready(mse_loss_v2(out3, tgt3))
    ref3 = ref_loss(out3, tgt3)
    assert jnp.allclose(loss3, ref3, rtol=2e-2, atol=2e-2), (loss3, ref3)

    print("KERNEL_OK")
</pallas_src>

<mosaic_0001>
module attributes {stable_mosaic.version = 11 : i64} {
  func.func @_mse_v2_kernel(%arg0: i32, %arg1: i32, %arg2: memref<1x512xf32, #tpu.memory_space<vmem>>, %arg3: memref<1x512xf32, #tpu.memory_space<vmem>>, %arg4: memref<1x1x1xf32, #tpu.memory_space<vmem>>, %arg5: memref<1x512xf32, #tpu.memory_space<vmem>>) attributes {dimension_semantics = [#tpu.dimension_semantics<parallel>, #tpu.dimension_semantics<arbitrary>], iteration_bounds = array<i64: 1, 1>, scalar_prefetch = 0 : i64, scratch_operands = 1 : i64, tpu.core_type = #tpu.core_type<tc>, window_params = [{transform_indices = @transform_0, window_bounds = array<i64: 1, 512>}, {transform_indices = @transform_1, window_bounds = array<i64: 1, 512>}, {transform_indices = @transform_2, window_bounds = array<i64: 1, 1, 1>}]} {
    %c0 = arith.constant 0 : index
    %c0_0 = arith.constant 0 : index
    %0 = vector.load %arg2[%c0, %c0_0] : memref<1x512xf32, #tpu.memory_space<vmem>>, vector<1x512xf32>
    %c0_1 = arith.constant 0 : index
    %c0_2 = arith.constant 0 : index
    %1 = vector.load %arg3[%c0_1, %c0_2] : memref<1x512xf32, #tpu.memory_space<vmem>>, vector<1x512xf32>
    %2 = arith.subf %0, %1 : vector<1x512xf32>
    %3 = arith.mulf %2, %2 : vector<1x512xf32>
    %4 = vector.shape_cast %3 : vector<1x512xf32> to vector<1x1x512xf32>
    %cst = arith.constant dense<0.000000e+00> : vector<1xf32>
    %5 = vector.multi_reduction <add>, %4, %cst [1, 2] : vector<1x1x512xf32> to vector<1xf32>
    %6 = vector.shape_cast %5 : vector<1xf32> to vector<1x1x1xf32>
    %7 = vector.extract %6[0, 0, 0] : f32 from vector<1x1x1xf32>
    %8 = vector.broadcast %7 : f32 to vector<1x1x1xf32>
    %c0_3 = arith.constant 0 : index
    %c0_4 = arith.constant 0 : index
    %c0_5 = arith.constant 0 : index
    %9 = vector.load %arg4[%c0_3, %c0_4, %c0_5] : memref<1x1x1xf32, #tpu.memory_space<vmem>>, vector<1x1x1xf32>
    tpu.vector_store %arg4[%c0_3, %c0_4, %c0_5], %8 {strides = array<i32>} : memref<1x1x1xf32, #tpu.memory_space<vmem>>, vector<1x1x1xf32>,
    return
  }
  func.func @transform_0(%arg0: i32, %arg1: i32) -> (i32, i32) {
    %c1_i32 = arith.constant 1 : i32
    %0 = arith.muli %arg0, %c1_i32 : i32
    %1 = arith.addi %0, %arg1 : i32
    %c0_i32 = arith.constant 0 : i32
    %c0_i32_0 = arith.constant 0 : i32
    return %1, %c0_i32 : i32, i32
  }
  func.func @transform_1(%arg0: i32, %arg1: i32) -> (i32, i32) {
    %c1_i32 = arith.constant 1 : i32
    %0 = arith.muli %arg0, %c1_i32 : i32
    %1 = arith.addi %0, %arg1 : i32
    %c0_i32 = arith.constant 0 : i32
    %c0_i32_0 = arith.constant 0 : i32
    return %1, %c0_i32 : i32, i32
  }
  func.func @transform_2(%arg0: i32, %arg1: i32) -> (i32, i32, i32) {
    %c0_i32 = arith.constant 0 : i32
    %c0_i32_0 = arith.constant 0 : i32
    %c0_i32_1 = arith.constant 0 : i32
    return %arg0, %c0_i32, %c0_i32_0 : i32, i32, i32
  }
}

</mosaic_0001>

<llo_original>
// kernel: tpu_custom_call.1
$region0: #{tpu_custom_call.1}
  #allocation0 [shape = 'u32[]', space=smem, size = 0x4, offset = 0x4, fixed_abs, tag = 'smem constant byte address 0x4 - core index']
  #allocation1 [shape = 'u32[144,128]{1,0:T(1,128)}', space=vmem, size = 0x12000, scoped, tag = 'internal scratch']
  #allocation2 [shape = 'f32[1,512]{1,0:T(1,128)}', space=vmem, size = 0x800, scoped, tag = 'scratch operand']
  %s0 = inlined_call_operand.hbm [shape: f32[1,512], index: 0, kind: input, shape index: {}]
  %s1 = inlined_call_operand.hbm [shape: f32[1,512], index: 1, kind: input, shape index: {}]
  %s2 = inlined_call_operand.hbm [shape: f32[1,1,1], index: 2, kind: output, shape index: {}]
  %s3 = sld [smem:[#allocation0]]
  $region26: #{tpu_custom_call.1} parent=0
    _
  %s5 = ssub.s32 1, %s3
  %s6 = scalar_select 0, %s5, %s3
  $region1: #{tpu_custom_call.1} parent=0
    #allocation3 [shape = 'u8[2048]{0}', space=vmem, size = 0x800, scoped, tag = 'input window, operand 0, single buffered']
    #allocation4 [shape = 's32[1]{0}', space=sflag, size = 0x4, scoped, tag = 'scoped memory for tpu_custom_call.1']
    #allocation5 [shape = 's32[1]{0}', space=sflag, size = 0x4, scoped, tag = 'scoped memory for tpu_custom_call.1']
    #allocation6 [shape = 'u8[2048]{0}', space=vmem, size = 0x800, scoped, tag = 'input window, operand 1, single buffered']
    #allocation7 [shape = 's32[1]{0}', space=sflag, size = 0x4, scoped, tag = 'scoped memory for tpu_custom_call.1']
    #allocation8 [shape = 'u8[512]{0}', space=vmem, size = 0x400, scoped, tag = 'output window, operand 0, single buffered']
    %7 = vsyncpa [#allocation4], 0
    %8 = vsyncpa [#allocation7], 0
    %9 = vsyncpa [#allocation5], 0
    // Predicated region
    $region2: #{tpu_custom_call.1} parent=1 // pred_check
      _
    $region3: #{tpu_custom_call.1} parent=1 // pred_check_branch
      %11 = sbr.rel (0) target = $region5
    $region4: #{tpu_custom_call.1} parent=1 // pred_region
      %s12 = sadd.s32 0, 0
      %s14 = ssub.s32 64, 64
      %15 = vsyncadd [#allocation4], %s14
      %s16 = smul.addr %s12, 4
      %s17 = smul.addr %s16, 16
      %s18 = scalar_lea.hbm %s0, %s17
      %s20 = sshll.u32 [#allocation3], 4
      %s21 = int_to_ptr.vmem [resolvable:$true] %s20
      %23 = dma.hbm_to_vmem [thread:$0]  %s18, 64, %s21, [#allocation4]
    $region5: #{tpu_custom_call.1} parent=1 // pred_fallthru
      _
    // Predicated region
    $region6: #{tpu_custom_call.1} parent=1 // pred_check
      _
    $region7: #{tpu_custom_call.1} parent=1 // pred_check_branch
      %25 = sbr.rel (0) target = $region9
    $region8: #{tpu_custom_call.1} parent=1 // pred_region
      %s26 = sadd.s32 0, 0
      %s28 = ssub.s32 64, 64
      %29 = vsyncadd [#allocation7], %s28
      %s30 = smul.addr %s26, 4
      %s31 = smul.addr %s30, 16
      %s32 = scalar_lea.hbm %s1, %s31
      %s34 = sshll.u32 [#allocation6], 4
      %s35 = int_to_ptr.vmem [resolvable:$true] %s34
      %37 = dma.hbm_to_vmem [thread:$0]  %s32, 64, %s35, [#allocation7]
    $region9: #{tpu_custom_call.1} parent=1 // pred_fallthru
      _
    // Predicated region
    $region10: #{tpu_custom_call.1} parent=1 // pred_check
      _
    $region11: #{tpu_custom_call.1} parent=1 // pred_check_branch
      %39 = sbr.rel (0) target = $region13
    $region12: #{tpu_custom_call.1} parent=1 // pred_region
      %40 = dma.done [#allocation4], 64
    $region13: #{tpu_custom_call.1} parent=1 // pred_fallthru
      _
    // Predicated region
    $region14: #{tpu_custom_call.1} parent=1 // pred_check
      _
    $region15: #{tpu_custom_call.1} parent=1 // pred_check_branch
      %42 = sbr.rel (0) target = $region17
    $region16: #{tpu_custom_call.1} parent=1 // pred_region
      %43 = dma.done [#allocation7], 64
    $region17: #{tpu_custom_call.1} parent=1 // pred_fallthru
      _
    %s44 = sadd.s32 0, 0
    %s45 = sadd.s32 0, 0
    %v46 = vld [vmem:[#allocation3] sm:$0xf]
    %v47 = vld [vmem:[#allocation6] sm:$0xf]
    %v48 = vsub.f32 %v46, %v47
    %v49 = vmul.f32 %v48, %v48
    %v51 = vlaneseq
    %v52 = vshrl.u32 %v51, 7
    %v53 = vsub.s32 0, %v52
    %v54 = vrot.slane %v49, %v53
    %v55 = vlaneseq
    %v56 = vshrl.u32 %v55, 7
    %v57 = vsub.s32 1, %v56
    %v58 = vrot.slane %v49, %v57
    %v59 = vlaneseq
    %v60 = vshrl.u32 %v59, 7
    %v61 = vsub.s32 2, %v60
    %v62 = vrot.slane %v49, %v61
    %v63 = vlaneseq
    %v64 = vshrl.u32 %v63, 7
    %v65 = vsub.s32 3, %v64
    %v66 = vrot.slane %v49, %v65
    %vm71 = vcmask 1040384
    %v72 = vsel %vm71, %v54, 0.0
    %v73 = vsel %vm71, %v58, 0.0
    %v74 = vadd.f32 %v72, %v73
    %v75 = vsel %vm71, %v62, 0.0
    %v76 = vadd.f32 %v74, %v75
    %v77 = vsel %vm71, %v66, 0.0
    %v78 = vadd.f32 %v76, %v77
    %79 = vadd.xlane.f32.xlu0 %v78
    %v80 = vpop.xlane.xlu0 %79
    %v81 = vrot.slane %v80, 4
    %v82 = vadd.f32 %v80, %v81
    %v83 = vrot.slane %v82, 2
    %v84 = vadd.f32 %v82, %v83
    %v85 = vrot.slane %v84, 1
    %v86 = vadd.f32 %v84, %v85
    %s87 = vtos %v86
    %v88 = vstv %s87
    %vm89 = vcmask 0
    %90 = vst.msk [vmem:[#allocation8] sm:$0x1] %vm89, %v88
    // Predicated region
    $region18: #{tpu_custom_call.1} parent=1 // pred_check
      _
    $region19: #{tpu_custom_call.1} parent=1 // pred_check_branch
      %92 = sbr.rel (0) target = $region21
    $region20: #{tpu_custom_call.1} parent=1 // pred_region
      %s94 = ssub.s32 16, 16
      %95 = vsyncadd [#allocation5], %s94
      %s97 = sshll.u32 [#allocation8], 4
      %s98 = int_to_ptr.vmem [resolvable:$true] %s97
      %100 = dma.vmem_to_hbm [thread:$0]  %s98, 16, %s2, [#allocation5]
    $region21: #{tpu_custom_call.1} parent=1 // pred_fallthru
      _
    // Predicated region
    $region22: #{tpu_custom_call.1} parent=1 // pred_check
      _
    $region23: #{tpu_custom_call.1} parent=1 // pred_check_branch
      %102 = sbr.rel (0) target = $region25
    $region24: #{tpu_custom_call.1} parent=1 // pred_region
      %103 = dma.done [#allocation5], 16
    $region25: #{tpu_custom_call.1} parent=1 // pred_fallthru
      _
    %104 = vsyncpa [#allocation4], 1
    %105 = vsyncpa [#allocation7], 1
    %106 = vsyncpa [#allocation5], 1

</llo_original>
